<compile_context>
chip_gen: v5e
topology: v5e:2x2
jax: 0.10.0
libtpu: 0.0.40
codegen_flags: <defaults>
</compile_context>

<pallas_src>
import jax
import jax.numpy as jnp
from jax.experimental import pallas as pl
from jax.experimental.pallas import tpu as pltpu

NEG_SLOPE = 0.01  # nn.LeakyReLU default


def _mlp_kernel(x_ref, w1_ref, b1_ref, w2_ref, b2_ref, w3_ref, b3_ref, o_ref):
    # x_ref: (TM, HW) f32 — one tile of rows, full spatial extent.
    # AdaptiveAvgPool2d(1): lane-sum only; 1/HW is pre-folded into w1.
    s = jnp.sum(x_ref[...], axis=-1, keepdims=True)            # (TM, 1)

    # Linear(1, hidden): (TM,1) broadcast against (1,hidden); w1 pre-scaled by 1/HW.
    h = s * w1_ref[...] + b1_ref[...]
    h = jnp.where(h > 0, h, NEG_SLOPE * h)                      # LeakyReLU

    # Linear(hidden, hidden) on MXU.
    h = jnp.dot(h, w2_ref[...], preferred_element_type=jnp.float32) + b2_ref[...]
    h = jnp.where(h > 0, h, NEG_SLOPE * h)                      # LeakyReLU

    # Linear(hidden, out_f) on MXU (out dim padded to 128 lanes -> dense stores).
    y = jnp.dot(h, w3_ref[...], preferred_element_type=jnp.float32) + b3_ref[...]

    o_ref[...] = y.astype(o_ref.dtype)


def mlp_forward(x, params, *, max_tile_m=1024, x_vmem_budget_bytes=24 << 20):
    """x: (N, C, H, W) float32.  Returns (N, C, 1, out_f), matching PyTorch."""
    N, C, H, W = x.shape
    M, HW = N * C, H * W
    x2d = x.reshape(M, HW)

    w1t, b1, w2t, b2, w3t, b3 = params  # weights already transposed to (in, out)
    hidden = w2t.shape[0]
    out_f = w3t.shape[1]

    # Fold the AdaptiveAvgPool 1/HW scale into the first Linear's weight.
    w1s = (w1t * (1.0 / float(HW))).astype(jnp.float32)

    # Pad the last layer to a lane-dense width (multiple of 128).
    out_pad = max(128, ((out_f + 127) // 128) * 128)
    w3p = jnp.zeros((hidden, out_pad), jnp.float32).at[:, :out_f].set(w3t)
    b3p = jnp.zeros((1, out_pad), jnp.float32).at[:, :out_f].set(b3)

    # Pick tile_m: big DMAs within a conservative budget for the double-buffered
    # x tile, multiple of 8, and small enough to leave >= 2 grid steps when M
    # allows it (so both v7x TensorCores are fed on the "parallel" axis).
    bytes_per_x_row = HW * 4
    cap_vmem = max(8, (x_vmem_budget_bytes // (2 * bytes_per_x_row)) // 8 * 8)
    cap_split = max(8, (((M + 1) // 2) + 7) // 8 * 8)
    tile_m = int(min(max_tile_m, cap_vmem, cap_split))

    # Tail handling: pad rows up to a multiple of tile_m (padded rows sliced off).
    m_pad = pl.cdiv(M, tile_m) * tile_m
    if m_pad != M:
        x2d = jnp.pad(x2d, ((0, m_pad - M), (0, 0)))

    grid = (m_pad // tile_m,)

    out2d = pl.pallas_call(
        _mlp_kernel,
        out_shape=jax.ShapeDtypeStruct((m_pad, out_pad), jnp.float32),
        grid_spec=pltpu.PrefetchScalarGridSpec(
            num_scalar_prefetch=0,
            grid=grid,
            in_specs=[
                pl.BlockSpec((tile_m, HW), lambda i: (i, 0)),       # x row tile
                pl.BlockSpec((1, hidden), lambda i: (0, 0)),        # w1^T / HW
                pl.BlockSpec((1, hidden), lambda i: (0, 0)),        # b1
                pl.BlockSpec((hidden, hidden), lambda i: (0, 0)),   # w2^T
                pl.BlockSpec((1, hidden), lambda i: (0, 0)),        # b2
                pl.BlockSpec((hidden, out_pad), lambda i: (0, 0)),  # w3^T (padded)
                pl.BlockSpec((1, out_pad), lambda i: (0, 0)),       # b3 (padded)
            ],
            out_specs=pl.BlockSpec((tile_m, out_pad), lambda i: (i, 0)),
        ),
        compiler_params=pltpu.CompilerParams(
            dimension_semantics=("parallel",),
            vmem_limit_bytes=48 * 1024 * 1024,
        ),
    )(x2d, w1s, b1, w2t, b2, w3p, b3p)

    # Drop row padding and lane padding; PyTorch output shape is (N, C, 1, out_f).
    return out2d[:M, :out_f].reshape(N, C, 1, out_f)


def init_params(key, in_f, hidden_dim, out_f):
    """Deterministic init mimicking nn.Linear (uniform +/- 1/sqrt(fan_in))."""
    ks = jax.random.split(key, 6)

    def lin(kw, kb, fan_in, fan_out):
        bound = 1.0 / jnp.sqrt(jnp.float32(fan_in))
        # torch stores weight as (out, in); we keep the transposed (in, out) layout
        w_t = jax.random.uniform(kw, (fan_in, fan_out), jnp.float32, -bound, bound)
        b = jax.random.uniform(kb, (1, fan_out), jnp.float32, -bound, bound)
        return w_t, b

    w1t, b1 = lin(ks[0], ks[1], in_f, hidden_dim)
    w2t, b2 = lin(ks[2], ks[3], hidden_dim, hidden_dim)
    w3t, b3 = lin(ks[4], ks[5], hidden_dim, out_f)
    return (w1t, b1, w2t, b2, w3t, b3)


if __name__ == "__main__":
    key = jax.random.PRNGKey(0)
    kx, kp = jax.random.split(key)

    # Small shapes consistent with the module's forward:
    # x is NCHW; in_f must be 1 (Linear acts on the trailing singleton after pooling).
    N, C, H, W = 2, 4, 16, 16
    in_f, hidden_dim, out_f = 1, 32, 8

    x = jax.random.normal(kx, (N, C, H, W), dtype=jnp.float32)
    params = init_params(kp, in_f, hidden_dim, out_f)

    out = mlp_forward(x, params)
    out = jax.block_until_ready(out)

    # Pure-JAX reference of the same math (pool -> linear/leaky chain).
    pooled = jnp.mean(x, axis=(2, 3), keepdims=True)                 # (N,C,1,1)
    w1t, b1, w2t, b2, w3t, b3 = params
    ref = pooled.reshape(N * C, 1) * w1t + b1
    ref = jnp.where(ref > 0, ref, NEG_SLOPE * ref)
    ref = ref @ w2t + b2
    ref = jnp.where(ref > 0, ref, NEG_SLOPE * ref)
    ref = (ref @ w3t + b3).reshape(N, C, 1, out_f)

    assert out.shape == (N, C, 1, out_f), out.shape
    assert jnp.allclose(out, ref, atol=1e-5, rtol=1e-5)

    print("KERNEL_OK")
</pallas_src>

<mosaic_0001>
module attributes {stable_mosaic.version = 11 : i64} {
  func.func @_mlp_kernel(%arg0: i32, %arg1: memref<8x256xf32, #tpu.memory_space<vmem>>, %arg2: memref<1x32xf32, #tpu.memory_space<vmem>>, %arg3: memref<1x32xf32, #tpu.memory_space<vmem>>, %arg4: memref<32x32xf32, #tpu.memory_space<vmem>>, %arg5: memref<1x32xf32, #tpu.memory_space<vmem>>, %arg6: memref<32x128xf32, #tpu.memory_space<vmem>>, %arg7: memref<1x128xf32, #tpu.memory_space<vmem>>, %arg8: memref<8x128xf32, #tpu.memory_space<vmem>>) attributes {dimension_semantics = [#tpu.dimension_semantics<parallel>], iteration_bounds = array<i64: 1>, scalar_prefetch = 0 : i64, scratch_operands = 0 : i64, tpu.core_type = #tpu.core_type<tc>, window_params = [{transform_indices = @transform_0, window_bounds = array<i64: 8, 256>}, {pipeline_mode = #tpu.pipeline_mode<synchronous>, transform_indices = @transform_1, window_bounds = array<i64: 1, 32>}, {pipeline_mode = #tpu.pipeline_mode<synchronous>, transform_indices = @transform_2, window_bounds = array<i64: 1, 32>}, {pipeline_mode = #tpu.pipeline_mode<synchronous>, transform_indices = @transform_3, window_bounds = array<i64: 32, 32>}, {pipeline_mode = #tpu.pipeline_mode<synchronous>, transform_indices = @transform_4, window_bounds = array<i64: 1, 32>}, {pipeline_mode = #tpu.pipeline_mode<synchronous>, transform_indices = @transform_5, window_bounds = array<i64: 32, 128>}, {pipeline_mode = #tpu.pipeline_mode<synchronous>, transform_indices = @transform_6, window_bounds = array<i64: 1, 128>}, {transform_indices = @transform_7, window_bounds = array<i64: 8, 128>}]} {
    %c0 = arith.constant 0 : index
    %c0_0 = arith.constant 0 : index
    %0 = vector.load %arg1[%c0, %c0_0] : memref<8x256xf32, #tpu.memory_space<vmem>>, vector<8x256xf32>
    %cst = arith.constant dense<0.000000e+00> : vector<8xf32>
    %1 = vector.multi_reduction <add>, %0, %cst [1] : vector<8x256xf32> to vector<8xf32>
    %2 = vector.shape_cast %1 : vector<8xf32> to vector<8x1xf32>
    %c0_1 = arith.constant 0 : index
    %c0_2 = arith.constant 0 : index
    %3 = vector.load %arg2[%c0_1, %c0_2] : memref<1x32xf32, #tpu.memory_space<vmem>>, vector<1x32xf32>
    %4 = vector.broadcast %2 : vector<8x1xf32> to vector<8x32xf32>
    %5 = vector.broadcast %3 : vector<1x32xf32> to vector<8x32xf32>
    %6 = arith.mulf %4, %5 : vector<8x32xf32>
    %c0_3 = arith.constant 0 : index
    %c0_4 = arith.constant 0 : index
    %7 = vector.load %arg3[%c0_3, %c0_4] : memref<1x32xf32, #tpu.memory_space<vmem>>, vector<1x32xf32>
    %8 = vector.broadcast %7 : vector<1x32xf32> to vector<8x32xf32>
    %9 = arith.addf %6, %8 : vector<8x32xf32>
    %cst_5 = arith.constant 0.000000e+00 : f32
    %10 = vector.broadcast %cst_5 : f32 to vector<8x32xf32>
    %11 = arith.cmpf ogt, %9, %10 : vector<8x32xf32>
    %cst_6 = arith.constant 0.00999999977 : f32
    %12 = vector.broadcast %cst_6 : f32 to vector<8x32xf32>
    %13 = arith.mulf %12, %9 : vector<8x32xf32>
    %14 = arith.select %11, %9, %13 : vector<8x32xi1>, vector<8x32xf32>
    %c0_7 = arith.constant 0 : index
    %c0_8 = arith.constant 0 : index
    %15 = vector.load %arg4[%c0_7, %c0_8] : memref<32x32xf32, #tpu.memory_space<vmem>>, vector<32x32xf32>
    %cst_9 = arith.constant dense<0.000000e+00> : vector<8x32xf32>
    %16 = tpu.matmul %14, %15, %cst_9 {dimension_numbers = #tpu.dot_dimension_numbers<[1], [0], [0], [1], [0, 0, 1, 1], [], []>} : vector<8x32xf32>, vector<32x32xf32>, vector<8x32xf32> -> vector<8x32xf32>
    %c0_10 = arith.constant 0 : index
    %c0_11 = arith.constant 0 : index
    %17 = vector.load %arg5[%c0_10, %c0_11] : memref<1x32xf32, #tpu.memory_space<vmem>>, vector<1x32xf32>
    %18 = vector.broadcast %17 : vector<1x32xf32> to vector<8x32xf32>
    %19 = arith.addf %16, %18 : vector<8x32xf32>
    %cst_12 = arith.constant 0.000000e+00 : f32
    %20 = vector.broadcast %cst_12 : f32 to vector<8x32xf32>
    %21 = arith.cmpf ogt, %19, %20 : vector<8x32xf32>
    %cst_13 = arith.constant 0.00999999977 : f32
    %22 = vector.broadcast %cst_13 : f32 to vector<8x32xf32>
    %23 = arith.mulf %22, %19 : vector<8x32xf32>
    %24 = arith.select %21, %19, %23 : vector<8x32xi1>, vector<8x32xf32>
    %c0_14 = arith.constant 0 : index
    %c0_15 = arith.constant 0 : index
    %25 = vector.load %arg6[%c0_14, %c0_15] : memref<32x128xf32, #tpu.memory_space<vmem>>, vector<32x128xf32>
    %cst_16 = arith.constant dense<0.000000e+00> : vector<8x128xf32>
    %26 = tpu.matmul %24, %25, %cst_16 {dimension_numbers = #tpu.dot_dimension_numbers<[1], [0], [0], [1], [0, 0, 1, 1], [], []>} : vector<8x32xf32>, vector<32x128xf32>, vector<8x128xf32> -> vector<8x128xf32>
    %c0_17 = arith.constant 0 : index
    %c0_18 = arith.constant 0 : index
    %27 = vector.load %arg7[%c0_17, %c0_18] : memref<1x128xf32, #tpu.memory_space<vmem>>, vector<1x128xf32>
    %28 = vector.broadcast %27 : vector<1x128xf32> to vector<8x128xf32>
    %29 = arith.addf %26, %28 : vector<8x128xf32>
    %c0_19 = arith.constant 0 : index
    %c0_20 = arith.constant 0 : index
    %30 = vector.load %arg8[%c0_19, %c0_20] : memref<8x128xf32, #tpu.memory_space<vmem>>, vector<8x128xf32>
    tpu.vector_store %arg8[%c0_19, %c0_20], %29 {strides = array<i32>} : memref<8x128xf32, #tpu.memory_space<vmem>>, vector<8x128xf32>,
    return
  }
  func.func @transform_0(%arg0: i32) -> (i32, i32) {
    %c0_i32 = arith.constant 0 : i32
    %c0_i32_0 = arith.constant 0 : i32
    return %arg0, %c0_i32 : i32, i32
  }
  func.func @transform_1(%arg0: i32) -> (i32, i32) {
    %c0_i32 = arith.constant 0 : i32
    %c0_i32_0 = arith.constant 0 : i32
    %c0_i32_1 = arith.constant 0 : i32
    return %c0_i32, %c0_i32_0 : i32, i32
  }
  func.func @transform_2(%arg0: i32) -> (i32, i32) {
    %c0_i32 = arith.constant 0 : i32
    %c0_i32_0 = arith.constant 0 : i32
    %c0_i32_1 = arith.constant 0 : i32
    return %c0_i32, %c0_i32_0 : i32, i32
  }
  func.func @transform_3(%arg0: i32) -> (i32, i32) {
    %c0_i32 = arith.constant 0 : i32
    %c0_i32_0 = arith.constant 0 : i32
    %c0_i32_1 = arith.constant 0 : i32
    return %c0_i32, %c0_i32_0 : i32, i32
  }
  func.func @transform_4(%arg0: i32) -> (i32, i32) {
    %c0_i32 = arith.constant 0 : i32
    %c0_i32_0 = arith.constant 0 : i32
    %c0_i32_1 = arith.constant 0 : i32
    return %c0_i32, %c0_i32_0 : i32, i32
  }
  func.func @transform_5(%arg0: i32) -> (i32, i32) {
    %c0_i32 = arith.constant 0 : i32
    %c0_i32_0 = arith.constant 0 : i32
    %c0_i32_1 = arith.constant 0 : i32
    return %c0_i32, %c0_i32_0 : i32, i32
  }
  func.func @transform_6(%arg0: i32) -> (i32, i32) {
    %c0_i32 = arith.constant 0 : i32
    %c0_i32_0 = arith.constant 0 : i32
    %c0_i32_1 = arith.constant 0 : i32
    return %c0_i32, %c0_i32_0 : i32, i32
  }
  func.func @transform_7(%arg0: i32) -> (i32, i32) {
    %c0_i32 = arith.constant 0 : i32
    %c0_i32_0 = arith.constant 0 : i32
    return %arg0, %c0_i32 : i32, i32
  }
}

</mosaic_0001>

<llo_original>
// kernel: tpu_custom_call.1
$region0: #{tpu_custom_call.1}
  #allocation0 [shape = 'u32[]', space=smem, size = 0x4, offset = 0x4, fixed_abs, tag = 'smem constant byte address 0x4 - core index']
  #allocation1 [shape = 'u32[72,128]{1,0:T(1,128)}', space=vmem, size = 0x9000, scoped, tag = 'internal scratch']
  %s0 = inlined_call_operand.hbm [shape: f32[8,256], index: 0, kind: input, shape index: {}]
  %s1 = inlined_call_operand.hbm [shape: f32[1,32], index: 1, kind: input, shape index: {}]
  %s2 = inlined_call_operand.vmem [shape: f32[1,32], index: 2, kind: input, shape index: {}]
  %s3 = inlined_call_operand.hbm [shape: f32[32,32], index: 3, kind: input, shape index: {}]
  %s4 = inlined_call_operand.vmem [shape: f32[1,32], index: 4, kind: input, shape index: {}]
  %s5 = inlined_call_operand.hbm [shape: f32[32,128], index: 5, kind: input, shape index: {}]
  %s6 = inlined_call_operand.vmem [shape: f32[1,128], index: 6, kind: input, shape index: {}]
  %s7 = inlined_call_operand.hbm [shape: f32[8,128], index: 7, kind: output, shape index: {}]
  %s8 = sld [smem:[#allocation0]]
  $region54: #{tpu_custom_call.1} parent=0
    _
  %s10 = ssub.s32 1, %s8
  %s11 = scalar_select 0, %s10, %s8
  $region1: #{tpu_custom_call.1} parent=0
    #allocation2 [shape = 'u8[8192]{0}', space=vmem, size = 0x2000, scoped, tag = 'input window, operand 0, single buffered']
    #allocation3 [shape = 's32[1]{0}', space=sflag, size = 0x4, scoped, tag = 'scoped memory for tpu_custom_call.1']
    #allocation4 [shape = 's32[1]{0}', space=sflag, size = 0x4, scoped, tag = 'scoped memory for tpu_custom_call.1']
    #allocation5 [shape = 'u8[512]{0}', space=vmem, size = 0x400, scoped, tag = 'input window, operand 1, single buffered']
    #allocation6 [shape = 's32[1]{0}', space=sflag, size = 0x4, scoped, tag = 'scoped memory for tpu_custom_call.1']
    #allocation7 [shape = 'u8[16384]{0}', space=vmem, size = 0x4000, scoped, tag = 'input window, operand 3, single buffered']
    #allocation8 [shape = 'u8[16384]{0}', space=vmem, size = 0x4000, scoped, tag = 'input window, operand 5, single buffered']
    #allocation9 [shape = 's32[1]{0}', space=sflag, size = 0x4, scoped, tag = 'scoped memory for tpu_custom_call.1']
    #allocation10 [shape = 'u8[4096]{0}', space=vmem, size = 0x1000, scoped, tag = 'output window, operand 0, single buffered']
    %12 = vsyncpa [#allocation3], 0
    %13 = vsyncpa [#allocation6], 0
    %14 = vsyncpa [#allocation9], 0
    %15 = vsyncpa [#allocation4], 0
    // Predicated region
    $region2: #{tpu_custom_call.1} parent=1 // pred_check
      _
    $region3: #{tpu_custom_call.1} parent=1 // pred_check_branch
      %17 = sbr.rel (0) target = $region5
    $region4: #{tpu_custom_call.1} parent=1 // pred_region
      %19 = vsyncadd [#allocation3], 0
      %s21 = sshll.u32 %s0, 4
      %s22 = int_to_ptr.hbm [resolvable:$true] %s21
      %s23 = sshll.u32 [#allocation2], 4
      %s24 = int_to_ptr.vmem [resolvable:$true] %s23
      %26 = dma.hbm_to_vmem [thread:$0]  %s22, 256, %s24, [#allocation3]
    $region5: #{tpu_custom_call.1} parent=1 // pred_fallthru
      _
    // Predicated region
    $region6: #{tpu_custom_call.1} parent=1 // pred_check
      _
    $region7: #{tpu_custom_call.1} parent=1 // pred_check_branch
      %28 = sbr.rel (0) target = $region9
    $region8: #{tpu_custom_call.1} parent=1 // pred_region
      %30 = vsyncadd [#allocation6], 0
      %s32 = sshll.u32 %s1, 4
      %s33 = int_to_ptr.hbm [resolvable:$true] %s32
      %s34 = sshll.u32 [#allocation5], 4
      %s35 = int_to_ptr.vmem [resolvable:$true] %s34
      %37 = dma.hbm_to_vmem [thread:$0]  %s33, 16, %s35, [#allocation6]
    $region9: #{tpu_custom_call.1} parent=1 // pred_fallthru
      _
    // Predicated region
    $region10: #{tpu_custom_call.1} parent=1 // pred_check
      _
    $region11: #{tpu_custom_call.1} parent=1 // pred_check_branch
      %39 = sbr.rel (0) target = $region13
    $region12: #{tpu_custom_call.1} parent=1 // pred_region
      _
    $region13: #{tpu_custom_call.1} parent=1 // pred_fallthru
      _
    // Predicated region
    $region14: #{tpu_custom_call.1} parent=1 // pred_check
      _
    $region15: #{tpu_custom_call.1} parent=1 // pred_check_branch
      %41 = sbr.rel (0) target = $region17
    $region16: #{tpu_custom_call.1} parent=1 // pred_region
      %43 = vsyncadd [#allocation6], 0
      %s44 = sshll.u32 %s3, 4
      %s45 = int_to_ptr.hbm [resolvable:$true] %s44
      %s46 = sshll.u32 [#allocation7], 4
      %s47 = int_to_ptr.vmem [resolvable:$true] %s46
      %52 = dma.hbm_to_vmem [thread:$0]  %s45, 512, %s47, [#allocation6], 128, 128, 8
    $region17: #{tpu_custom_call.1} parent=1 // pred_fallthru
      _
    // Predicated region
    $region18: #{tpu_custom_call.1} parent=1 // pred_check
      _
    $region19: #{tpu_custom_call.1} parent=1 // pred_check_branch
      %54 = sbr.rel (0) target = $region21
    $region20: #{tpu_custom_call.1} parent=1 // pred_region
      _
    $region21: #{tpu_custom_call.1} parent=1 // pred_fallthru
      _
    // Predicated region
    $region22: #{tpu_custom_call.1} parent=1 // pred_check
      _
    $region23: #{tpu_custom_call.1} parent=1 // pred_check_branch
      %56 = sbr.rel (0) target = $region25
    $region24: #{tpu_custom_call.1} parent=1 // pred_region
      %58 = vsyncadd [#allocation9], 0
      %s59 = sshll.u32 %s5, 4
      %s60 = int_to_ptr.hbm [resolvable:$true] %s59
      %s61 = sshll.u32 [#allocation8], 4
      %s62 = int_to_ptr.vmem [resolvable:$true] %s61
      %67 = dma.hbm_to_vmem [thread:$0]  %s60, 512, %s62, [#allocation9], 128, 128, 8
    $region25: #{tpu_custom_call.1} parent=1 // pred_fallthru
      _
    // Predicated region
    $region26: #{tpu_custom_call.1} parent=1 // pred_check
      _
    $region27: #{tpu_custom_call.1} parent=1 // pred_check_branch
      %69 = sbr.rel (0) target = $region29
    $region28: #{tpu_custom_call.1} parent=1 // pred_region
      _
    $region29: #{tpu_custom_call.1} parent=1 // pred_fallthru
      _
    // Predicated region
    $region30: #{tpu_custom_call.1} parent=1 // pred_check
      _
    $region31: #{tpu_custom_call.1} parent=1 // pred_check_branch
      %71 = sbr.rel (0) target = $region33
    $region32: #{tpu_custom_call.1} parent=1 // pred_region
      %73 = dma.done [#allocation3], 256
    $region33: #{tpu_custom_call.1} parent=1 // pred_fallthru
      _
    // Predicated region
    $region34: #{tpu_custom_call.1} parent=1 // pred_check
      _
    $region35: #{tpu_custom_call.1} parent=1 // pred_check_branch
      %75 = sbr.rel (0) target = $region37
    $region36: #{tpu_custom_call.1} parent=1 // pred_region
      %77 = dma.done [#allocation6], 16
    $region37: #{tpu_custom_call.1} parent=1 // pred_fallthru
      _
    // Predicated region
    $region38: #{tpu_custom_call.1} parent=1 // pred_check
      _
    $region39: #{tpu_custom_call.1} parent=1 // pred_check_branch
      %79 = sbr.rel (0) target = $region41
    $region40: #{tpu_custom_call.1} parent=1 // pred_region
      %81 = dma.done [#allocation6], 512
    $region41: #{tpu_custom_call.1} parent=1 // pred_fallthru
      _
    // Predicated region
    $region42: #{tpu_custom_call.1} parent=1 // pred_check
      _
    $region43: #{tpu_custom_call.1} parent=1 // pred_check_branch
      %83 = sbr.rel (0) target = $region45
    $region44: #{tpu_custom_call.1} parent=1 // pred_region
      %85 = dma.done [#allocation9], 512
    $region45: #{tpu_custom_call.1} parent=1 // pred_fallthru
      _
    %v86 = vld [vmem:[#allocation2] sm:$0xff]
    %v87 = vld [vmem:[#allocation2 + $0x8] sm:$0xff]
    %v88 = vadd.f32 %v86, %v87
    %89 = vadd.xlane.f32.xlu0 %v88
    %v90 = vpop.xlane.xlu0 %89
    %v91 = vld [vmem:[#allocation5] sm:$0x1]
    %v93 = vperm.slane %v91, 0
    %v95 = vmul.f32 %v90, %v93
    %v96 = vld [vmem:[%s2] sm:$0x1]
    %v98 = vperm.slane %v96, 0
    %v100 = vadd.f32 %v95, %v98
    %vm101 = vcmp.gt.f32.partialorder %v100, 0.0
    %v102 = vmul.f32 %v100, 0.01
    %v103 = vsel %vm101, %v100, %v102
    %v104 = vld [vmem:[#allocation7] sm:$0xff]
    %v105 = vld [vmem:[#allocation7 + $0x8] sm:$0xff]
    %v106 = vld [vmem:[#allocation7 + $0x10] sm:$0xff]
    %v107 = vld [vmem:[#allocation7 + $0x18] sm:$0xff]
    %v108 = vld [vmem:[%s4] sm:$0x1]
    %v110 = vperm.slane %v108, 0
    %vm112 = vcmask 261120
    %v114 = vsel %vm112, %v103, 0
    %116 = vmatpush.msra.mxu0 0.0
    %117 = vmatpush.msra.mxu0 0.0
    %118 = vmatpush.msra.mxu0 0.0
    %119 = vmatpush.msra.mxu0 0.0
    %120 = vmatpush.msra.mxu0 0.0
    %121 = vmatpush.msra.mxu0 0.0
    %122 = vmatpush.msra.mxu0 0.0
    %123 = vmatpush.msra.mxu0 0.0
    %124 = vmatpush.msra.mxu0 0.0
    %125 = vmatpush.msra.mxu0 0.0
    %126 = vmatpush.msra.mxu0 0.0
    %127 = vmatpush.msra.mxu0 0.0
    %128 = vmatpush.msra.mxu0 %v107
    %129 = vmatpush.msra.mxu0 %v106
    %130 = vmatpush.msra.mxu0 %v105
    %131 = vmatpush.msra.mxu0 %v104
    %132 = vmatmul.f32.gmra.mxu0 %v114
    %v133 = vpop.f32.mrf.mxu0
    %v134 = vadd.f32 %v110, %v133
    %135 = vdwg.mxu0
    %vm136 = vcmp.gt.f32.partialorder %v134, 0.0
    %v137 = vmul.f32 %v134, 0.01
    %v138 = vsel %vm136, %v134, %v137
    %v139 = vld [vmem:[#allocation8] sm:$0xff]
    %v140 = vld [vmem:[#allocation8 + $0x8] sm:$0xff]
    %v141 = vld [vmem:[#allocation8 + $0x10] sm:$0xff]
    %v142 = vld [vmem:[#allocation8 + $0x18] sm:$0xff]
    %v143 = vld [vmem:[%s6] sm:$0x1]
    %v145 = vperm.slane %v143, 0
    %v148 = vsel %vm112, %v138, 0
    %150 = vmatpush.msra.mxu0 0.0
    %151 = vmatpush.msra.mxu0 0.0
    %152 = vmatpush.msra.mxu0 0.0
    %153 = vmatpush.msra.mxu0 0.0
    %154 = vmatpush.msra.mxu0 0.0
    %155 = vmatpush.msra.mxu0 0.0
    %156 = vmatpush.msra.mxu0 0.0
    %157 = vmatpush.msra.mxu0 0.0
    %158 = vmatpush.msra.mxu0 0.0
    %159 = vmatpush.msra.mxu0 0.0
    %160 = vmatpush.msra.mxu0 0.0
    %161 = vmatpush.msra.mxu0 0.0
    %162 = vmatpush.msra.mxu0 %v142
    %163 = vmatpush.msra.mxu0 %v141
    %164 = vmatpush.msra.mxu0 %v140
    %165 = vmatpush.msra.mxu0 %v139
    %166 = vmatmul.f32.gmra.mxu0 %v148
    %v167 = vpop.f32.mrf.mxu0
    %v168 = vadd.f32 %v145, %v167
    %169 = vdwg.mxu0
    %170 = vst [vmem:[#allocation10] sm:$0xff] %v168
    // Predicated region
    $region46: #{tpu_custom_call.1} parent=1 // pred_check
      _
    $region47: #{tpu_custom_call.1} parent=1 // pred_check_branch
      %172 = sbr.rel (0) target = $region49
    $region48: #{tpu_custom_call.1} parent=1 // pred_region
      %174 = vsyncadd [#allocation4], 0
      %s176 = sshll.u32 [#allocation10], 4
      %s177 = int_to_ptr.vmem [resolvable:$true] %s176
      %s178 = sshll.u32 %s7, 4
      %s179 = int_to_ptr.hbm [resolvable:$true] %s178
      %181 = dma.vmem_to_hbm [thread:$0]  %s177, 128, %s179, [#allocation4]
    $region49: #{tpu_custom_call.1} parent=1 // pred_fallthru
      _
    // Predicated region
    $region50: #{tpu_custom_call.1} parent=1 // pred_check
      _
    $region51: #{tpu_custom_call.1} parent=1 // pred_check_branch
      %183 = sbr.rel (0) target = $region53
    $region52: #{tpu_custom_call.1} parent=1 // pred_region
      %185 = dma.done [#allocation4], 128
    $region53: #{tpu_custom_call.1} parent=1 // pred_fallthru
      _
    %186 = vsyncpa [#allocation3], 1
    %187 = vsyncpa [#allocation6], 1
    %188 = vsyncpa [#allocation9], 1
    %189 = vsyncpa [#allocation4], 1

</llo_original>
